<compile_context>
chip_gen: v7x
topology: tpu7x:2x2x1
jax: 0.10.0
libtpu: 0.0.40
codegen_flags: <defaults>
</compile_context>

<pallas_src>
import jax
import jax.numpy as jnp
from jax.experimental import pallas as pl
from jax.experimental.pallas import tpu as pltpu


# ---------------------------------------------------------------------------
# Fused TemporalBlock kernel:
#   conv1 -> ReLU -> conv2 -> ReLU -> (+ residual / 1x1 downsample) -> ReLU
#   [-> fused `[:, -pre_len:, :]` + output Linear on the last block]
# Channels-last (rows, channels) layout: every dilated tap is one lane-dense
# MXU matmul accumulated in f32; all intermediates stay in VMEM.
# ---------------------------------------------------------------------------
def _temporal_block_kernel(*, k, d, t_out, in_len, c_in, c_out, lpad,
                           has_downsample, fuse_linear, out_dtype):
    p = (k - 1) * d              # causal context of one conv
    hl = t_out + p               # conv1-output rows conv2 needs (incl. zeros)
    h_lpad = max(0, lpad - p)    # conv1-output rows at true time < 0 (zeros)
    h_rows = hl - h_lpad         # conv1 rows actually computed
    xl = t_out + 2 * p           # padded-input rows conv1 reads

    def kernel(x_ref, w1_ref, b1_ref, w2_ref, b2_ref, *rest):
        pos = 0
        if has_downsample:
            wd_ref, bd_ref = rest[0], rest[1]
            pos = 2
        if fuse_linear:
            wl_ref, bl_ref = rest[pos], rest[pos + 1]
            pos += 2
        o_ref = rest[pos]
        hz_ref = rest[pos + 1]
        xz_ref = rest[pos + 2] if lpad > 0 else None

        # ---- conv1: k dilated taps, f32 MXU accumulation --------------------
        if lpad > 0:
            # Zero left context lives only in VMEM scratch, never in HBM.
            xz_ref[pl.ds(0, lpad), :] = jnp.zeros((lpad, c_in), out_dtype)
            xz_ref[pl.ds(lpad, in_len), :] = x_ref[...]
            src = xz_ref
        else:
            src = x_ref            # no zero context needed: read input directly
        acc1 = jnp.zeros((h_rows, c_out), jnp.float32)
        for j in range(k):         # k is tiny (2) -> unrolled at trace time
            acc1 = acc1 + jnp.dot(src[pl.ds(h_lpad + j * d, h_rows), :],
                                  w1_ref[j],
                                  preferred_element_type=jnp.float32)
        h1 = jnp.maximum(acc1 + b1_ref[...], 0.0)     # bias + ReLU
        # dropout1: identity (inference)

        # conv2's causal left context (true time < 0) must be exact zeros: keep
        # it as zero rows of the scratch instead of masking computed rows.
        if h_lpad > 0:
            hz_ref[pl.ds(0, h_lpad), :] = jnp.zeros((h_lpad, c_out), out_dtype)
        hz_ref[pl.ds(h_lpad, h_rows), :] = h1.astype(out_dtype)

        # ---- conv2 -----------------------------------------------------------
        acc2 = jnp.zeros((t_out, c_out), jnp.float32)
        for j in range(k):
            acc2 = acc2 + jnp.dot(hz_ref[pl.ds(j * d, t_out), :], w2_ref[j],
                                  preferred_element_type=jnp.float32)
        out = jnp.maximum(acc2 + b2_ref[...], 0.0)
        # dropout2: identity (inference)

        # ---- residual (+ optional 1x1 downsample) + final ReLU ---------------
        xres = x_ref[pl.ds(in_len - t_out, t_out), :]
        if has_downsample:
            res = jnp.dot(xres, wd_ref[...],
                          preferred_element_type=jnp.float32) + bd_ref[...]
        else:
            res = xres.astype(jnp.float32)
        y = jnp.maximum(out + res, 0.0)

        # ---- fused `[:, -pre_len:, :]` + output Linear (last block only) -----
        if fuse_linear:
            y = jnp.dot(y.astype(wl_ref.dtype), wl_ref[...],
                        preferred_element_type=jnp.float32) + bl_ref[...]
        o_ref[...] = y.astype(out_dtype)

    return kernel


def temporal_block(x, w1, b1, w2, b2, w_down, b_down, *,
                   dilation, kernel_size, t_out, w_lin=None, b_lin=None):
    """One TemporalBlock on channels-last x: (N, in_len, C_in) -> (N, t_out, C).

    Emits only the last `t_out` rows of the block's output (receptive-field
    pruning).  If w_lin/b_lin are given, the output nn.Linear is fused into the
    epilogue and C = w_lin.shape[1]; otherwise C = C_out of the convolutions.
    """
    n, in_len, c_in = x.shape
    c_out = w1.shape[2]
    p = (kernel_size - 1) * dilation
    xl = t_out + 2 * p               # padded input rows the block consumes
    lpad = xl - in_len               # zero left-context rows (true time < 0)
    assert lpad >= 0, (lpad, xl, in_len)
    hl = t_out + p
    has_downsample = w_down is not None
    fuse_linear = w_lin is not None
    n_out = w_lin.shape[1] if fuse_linear else c_out

    in_specs = [
        pl.BlockSpec((None, in_len, c_in), lambda b: (b, 0, 0)),
        pl.BlockSpec((kernel_size, c_in, c_out), lambda b: (0, 0, 0)),
        pl.BlockSpec((1, c_out), lambda b: (0, 0)),
        pl.BlockSpec((kernel_size, c_out, c_out), lambda b: (0, 0, 0)),
        pl.BlockSpec((1, c_out), lambda b: (0, 0)),
    ]
    args = [x, w1, b1.reshape(1, c_out), w2, b2.reshape(1, c_out)]
    if has_downsample:
        in_specs += [pl.BlockSpec((c_in, c_out), lambda b: (0, 0)),
                     pl.BlockSpec((1, c_out), lambda b: (0, 0))]
        args += [w_down, b_down.reshape(1, c_out)]
    if fuse_linear:
        in_specs += [pl.BlockSpec((c_out, n_out), lambda b: (0, 0)),
                     pl.BlockSpec((1, n_out), lambda b: (0, 0))]
        args += [w_lin, b_lin.reshape(1, n_out)]

    scratch_shapes = [pltpu.VMEM((hl, c_out), x.dtype)]
    if lpad > 0:
        scratch_shapes.append(pltpu.VMEM((xl, c_in), x.dtype))

    kernel = _temporal_block_kernel(
        k=kernel_size, d=dilation, t_out=t_out, in_len=in_len,
        c_in=c_in, c_out=c_out, lpad=lpad,
        has_downsample=has_downsample, fuse_linear=fuse_linear,
        out_dtype=x.dtype)

    # VMEM budget: double-buffered activations + weights + scratch, with slack.
    itemsize = jnp.dtype(x.dtype).itemsize
    act_bytes = (in_len * c_in + t_out * n_out) * itemsize
    w_bytes = sum(int(a.size) for a in args[1:]) * itemsize
    scratch_bytes = (hl * c_out + (xl * c_in if lpad > 0 else 0)) * itemsize
    vmem_limit = int(min(100 * 2 ** 20,
                         max(32 * 2 ** 20,
                             4 * (2 * act_bytes + w_bytes + scratch_bytes))))

    return pl.pallas_call(
        kernel,
        out_shape=jax.ShapeDtypeStruct((n, t_out, n_out), x.dtype),
        grid_spec=pltpu.PrefetchScalarGridSpec(
            num_scalar_prefetch=0,
            grid=(n,),
            in_specs=in_specs,
            out_specs=pl.BlockSpec((None, t_out, n_out), lambda b: (b, 0, 0)),
            scratch_shapes=scratch_shapes,
        ),
        compiler_params=pltpu.CompilerParams(
            dimension_semantics=("parallel",),
            vmem_limit_bytes=vmem_limit),
    )(*args)


# ---------------------------------------------------------------------------
# Parameter handling (weight_norm + layout transposes hoisted, done once)
# ---------------------------------------------------------------------------
def _weight_norm(v, g):
    """PyTorch weight_norm (dim=0) for Conv1d weights v: (C_out, C_in, k)."""
    norm = jnp.sqrt(jnp.sum(v * v, axis=(1, 2), keepdims=True))
    return g * v / norm


def prepare_params(params):
    """Apply weight_norm and transpose weights into the (k, C_in, C_out) layout
    the kernels consume — run ONCE, outside the per-call forward path."""
    blocks = []
    for blk in params["blocks"]:
        w1 = jnp.transpose(_weight_norm(blk["v1"], blk["g1"]), (2, 1, 0))
        w2 = jnp.transpose(_weight_norm(blk["v2"], blk["g2"]), (2, 1, 0))
        if blk["w_down"] is None:
            w_down, b_down = None, None
        else:
            w_down = jnp.transpose(blk["w_down"][:, :, 0], (1, 0))
            b_down = blk["b_down"]
        blocks.append(dict(w1=w1, b1=blk["b1"], w2=w2, b2=blk["b2"],
                           w_down=w_down, b_down=b_down))
    return {"blocks": blocks, "w_lin": params["w_lin"], "b_lin": params["b_lin"]}


def tcn_forward(x, prepared, *, pre_len, kernel_size):
    """TemporalConvNet.forward for channels-last x: (N, L, num_inputs) ->
    (N, min(pre_len, L), outputs)."""
    _, seq_len, _ = x.shape
    blocks = prepared["blocks"]
    nb = len(blocks)

    # Receptive-field pruning: rows each block must emit so that the final
    # `[:, -pre_len:, :]` slice (and everything feeding it) is exact.
    needs = [0] * nb
    needs[nb - 1] = min(pre_len, seq_len)
    for i in range(nb - 2, -1, -1):
        p_next = (kernel_size - 1) * (2 ** (i + 1))
        needs[i] = min(seq_len, needs[i + 1] + 2 * p_next)

    h = x
    for i, blk in enumerate(blocks):
        dilation = 2 ** i
        p = (kernel_size - 1) * dilation
        t_out = needs[i]
        if i == 0:
            keep = min(seq_len, t_out + 2 * p)
            if keep < seq_len:                    # raw input is the only tensor
                h = h[:, seq_len - keep:, :]      # ever sliced in HBM
        last = i == nb - 1
        h = temporal_block(
            h, blk["w1"], blk["b1"], blk["w2"], blk["b2"],
            blk["w_down"], blk["b_down"],
            dilation=dilation, kernel_size=kernel_size, t_out=t_out,
            w_lin=prepared["w_lin"] if last else None,
            b_lin=prepared["b_lin"] if last else None)
    return h


def init_params(key, *, num_inputs, outputs, num_channels, kernel_size):
    params = {"blocks": []}
    c_in = num_inputs
    for c_out in num_channels:
        key, k1, k2, k3, k4, k5, k6, k7, k8 = jax.random.split(key, 9)
        blk = {
            "v1": 0.01 * jax.random.normal(k1, (c_out, c_in, kernel_size), jnp.float32),
            "g1": jax.random.uniform(k3, (c_out, 1, 1), jnp.float32, 0.5, 1.5),
            "b1": 0.1 * jax.random.normal(k4, (c_out,), jnp.float32),
            "v2": 0.01 * jax.random.normal(k2, (c_out, c_out, kernel_size), jnp.float32),
            "g2": jax.random.uniform(k5, (c_out, 1, 1), jnp.float32, 0.5, 1.5),
            "b2": 0.1 * jax.random.normal(k6, (c_out,), jnp.float32),
            "w_down": None,
            "b_down": None,
        }
        if c_in != c_out:
            blk["w_down"] = 0.01 * jax.random.normal(k7, (c_out, c_in, 1), jnp.float32)
            blk["b_down"] = 0.1 * jax.random.normal(k8, (c_out,), jnp.float32)
        params["blocks"].append(blk)
        c_in = c_out
    key, kl1, kl2 = jax.random.split(key, 3)
    params["w_lin"] = jax.random.normal(kl1, (num_channels[-1], outputs),
                                        jnp.float32) / jnp.sqrt(num_channels[-1])
    params["b_lin"] = 0.1 * jax.random.normal(kl2, (outputs,), jnp.float32)
    return params


# ---------------------------------------------------------------------------
# Pure-JAX reference (full-length computation, no pruning) for correctness
# ---------------------------------------------------------------------------
def _ref_causal_conv(x, w, b, dilation):
    k = w.shape[0]
    p = (k - 1) * dilation
    seq_len = x.shape[1]
    xp = jnp.pad(x, ((0, 0), (p, 0), (0, 0)))
    out = jnp.zeros(x.shape[:2] + (w.shape[2],), jnp.float32)
    for j in range(k):
        out = out + jnp.einsum("nlc,cd->nld",
                               xp[:, j * dilation: j * dilation + seq_len, :], w[j],
                               precision=jax.lax.Precision.HIGHEST)
    return out + b


def ref_forward(x, params, *, pre_len, kernel_size):
    h = x
    for i, blk in enumerate(params["blocks"]):
        dilation = 2 ** i
        w1 = jnp.transpose(_weight_norm(blk["v1"], blk["g1"]), (2, 1, 0))
        w2 = jnp.transpose(_weight_norm(blk["v2"], blk["g2"]), (2, 1, 0))
        a = jax.nn.relu(_ref_causal_conv(h, w1, blk["b1"], dilation))
        o = jax.nn.relu(_ref_causal_conv(a, w2, blk["b2"], dilation))
        if blk["w_down"] is None:
            res = h
        else:
            res = jnp.einsum("nlc,cd->nld", h,
                             jnp.transpose(blk["w_down"][:, :, 0], (1, 0)),
                             precision=jax.lax.Precision.HIGHEST) + blk["b_down"]
        h = jax.nn.relu(o + res)
    tail = h[:, -pre_len:, :]
    return jnp.einsum("ntc,co->nto", tail, params["w_lin"],
                      precision=jax.lax.Precision.HIGHEST) + params["b_lin"]


if __name__ == "__main__":
    # Small shapes consistent with the module: x is (batch, seq_len, num_inputs).
    # Three levels so the demo exercises: un-pruned block with zero left-context
    # scratch (block 0), pruned blocks with real context (1, 2), downsample and
    # identity residuals, and the fused tail linear.
    N, L = 2, 16
    num_inputs, outputs, pre_len = 4, 3, 4
    num_channels = [8, 16, 16]
    kernel_size = 2

    key = jax.random.PRNGKey(0)
    key, kx = jax.random.split(key)
    x = jax.random.normal(kx, (N, L, num_inputs), dtype=jnp.float32)
    params = init_params(key, num_inputs=num_inputs, outputs=outputs,
                         num_channels=num_channels, kernel_size=kernel_size)
    prepared = prepare_params(params)   # weight_norm + transposes, once

    out = tcn_forward(x, prepared, pre_len=pre_len, kernel_size=kernel_size)
    out = jax.block_until_ready(out)

    ref = ref_forward(x, params, pre_len=pre_len, kernel_size=kernel_size)
    assert out.shape == (N, pre_len, outputs), out.shape
    assert out.dtype == x.dtype
    max_err = float(jnp.max(jnp.abs(out - ref)))
    assert max_err < 5e-4, f"max abs error vs reference: {max_err}"

    print("KERNEL_OK")
</pallas_src>

<mosaic_0001>
module attributes {stable_mosaic.version = 11 : i64} {
  func.func @kernel(%arg0: i32, %arg1: memref<1x16x4xf32, #tpu.memory_space<vmem>>, %arg2: memref<2x4x8xf32, #tpu.memory_space<vmem>>, %arg3: memref<1x8xf32, #tpu.memory_space<vmem>>, %arg4: memref<2x8x8xf32, #tpu.memory_space<vmem>>, %arg5: memref<1x8xf32, #tpu.memory_space<vmem>>, %arg6: memref<4x8xf32, #tpu.memory_space<vmem>>, %arg7: memref<1x8xf32, #tpu.memory_space<vmem>>, %arg8: memref<1x16x8xf32, #tpu.memory_space<vmem>>, %arg9: memref<17x8xf32, #tpu.memory_space<vmem>>, %arg10: memref<18x4xf32, #tpu.memory_space<vmem>>) attributes {dimension_semantics = [#tpu.dimension_semantics<parallel>], iteration_bounds = array<i64: 2>, scalar_prefetch = 0 : i64, scratch_operands = 2 : i64, tpu.core_type = #tpu.core_type<tc>, window_params = [{transform_indices = @transform_0, window_bounds = array<i64: 1, 16, 4>}, {pipeline_mode = #tpu.pipeline_mode<synchronous>, transform_indices = @transform_1, window_bounds = array<i64: 2, 4, 8>}, {pipeline_mode = #tpu.pipeline_mode<synchronous>, transform_indices = @transform_2, window_bounds = array<i64: 1, 8>}, {pipeline_mode = #tpu.pipeline_mode<synchronous>, transform_indices = @transform_3, window_bounds = array<i64: 2, 8, 8>}, {pipeline_mode = #tpu.pipeline_mode<synchronous>, transform_indices = @transform_4, window_bounds = array<i64: 1, 8>}, {pipeline_mode = #tpu.pipeline_mode<synchronous>, transform_indices = @transform_5, window_bounds = array<i64: 4, 8>}, {pipeline_mode = #tpu.pipeline_mode<synchronous>, transform_indices = @transform_6, window_bounds = array<i64: 1, 8>}, {transform_indices = @transform_7, window_bounds = array<i64: 1, 16, 8>}]} {
    %cst = arith.constant 0.000000e+00 : f32
    %0 = vector.broadcast %cst : f32 to vector<2x4xf32>
    %c0 = arith.constant 0 : index
    %c0_0 = arith.constant 0 : index
    %1 = vector.load %arg10[%c0, %c0_0] : memref<18x4xf32, #tpu.memory_space<vmem>>, vector<2x4xf32>
    tpu.vector_store %arg10[%c0, %c0_0], %0 {strides = array<i32>} : memref<18x4xf32, #tpu.memory_space<vmem>>, vector<2x4xf32>,
    %c0_1 = arith.constant 0 : index
    %c0_2 = arith.constant 0 : index
    %c0_3 = arith.constant 0 : index
    %2 = vector.load %arg1[%c0_1, %c0_2, %c0_3] : memref<1x16x4xf32, #tpu.memory_space<vmem>>, vector<1x16x4xf32>
    %3 = vector.shape_cast %2 : vector<1x16x4xf32> to vector<16x4xf32>
    %c2 = arith.constant 2 : index
    %c0_4 = arith.constant 0 : index
    %4 = vector.load %arg10[%c2, %c0_4] : memref<18x4xf32, #tpu.memory_space<vmem>>, vector<16x4xf32>
    tpu.vector_store %arg10[%c2, %c0_4], %3 {strides = array<i32>} : memref<18x4xf32, #tpu.memory_space<vmem>>, vector<16x4xf32>,
    %cst_5 = arith.constant 0.000000e+00 : f32
    %5 = vector.broadcast %cst_5 : f32 to vector<16x8xf32>
    %c1 = arith.constant 1 : index
    %c0_6 = arith.constant 0 : index
    %6 = vector.load %arg10[%c1, %c0_6] : memref<18x4xf32, #tpu.memory_space<vmem>>, vector<16x4xf32>
    %c0_7 = arith.constant 0 : index
    %c0_8 = arith.constant 0 : index
    %c0_9 = arith.constant 0 : index
    %7 = vector.load %arg2[%c0_7, %c0_8, %c0_9] : memref<2x4x8xf32, #tpu.memory_space<vmem>>, vector<1x4x8xf32>
    %8 = vector.shape_cast %7 : vector<1x4x8xf32> to vector<4x8xf32>
    %cst_10 = arith.constant dense<0.000000e+00> : vector<16x8xf32>
    %9 = tpu.matmul %6, %8, %cst_10 {dimension_numbers = #tpu.dot_dimension_numbers<[1], [0], [0], [1], [0, 0, 1, 1], [], []>} : vector<16x4xf32>, vector<4x8xf32>, vector<16x8xf32> -> vector<16x8xf32>
    %10 = arith.addf %5, %9 : vector<16x8xf32>
    %c2_11 = arith.constant 2 : index
    %c0_12 = arith.constant 0 : index
    %11 = vector.load %arg10[%c2_11, %c0_12] : memref<18x4xf32, #tpu.memory_space<vmem>>, vector<16x4xf32>
    %c1_13 = arith.constant 1 : index
    %c0_14 = arith.constant 0 : index
    %c0_15 = arith.constant 0 : index
    %12 = vector.load %arg2[%c1_13, %c0_14, %c0_15] : memref<2x4x8xf32, #tpu.memory_space<vmem>>, vector<1x4x8xf32>
    %13 = vector.shape_cast %12 : vector<1x4x8xf32> to vector<4x8xf32>
    %cst_16 = arith.constant dense<0.000000e+00> : vector<16x8xf32>
    %14 = tpu.matmul %11, %13, %cst_16 {dimension_numbers = #tpu.dot_dimension_numbers<[1], [0], [0], [1], [0, 0, 1, 1], [], []>} : vector<16x4xf32>, vector<4x8xf32>, vector<16x8xf32> -> vector<16x8xf32>
    %15 = arith.addf %10, %14 : vector<16x8xf32>
    %c0_17 = arith.constant 0 : index
    %c0_18 = arith.constant 0 : index
    %16 = vector.load %arg3[%c0_17, %c0_18] : memref<1x8xf32, #tpu.memory_space<vmem>>, vector<1x8xf32>
    %17 = vector.broadcast %16 : vector<1x8xf32> to vector<16x8xf32>
    %18 = arith.addf %15, %17 : vector<16x8xf32>
    %cst_19 = arith.constant 0.000000e+00 : f32
    %19 = vector.broadcast %cst_19 : f32 to vector<16x8xf32>
    %20 = arith.maximumf %18, %19 : vector<16x8xf32>
    %cst_20 = arith.constant 0.000000e+00 : f32
    %21 = vector.broadcast %cst_20 : f32 to vector<1x8xf32>
    %c0_21 = arith.constant 0 : index
    %c0_22 = arith.constant 0 : index
    %22 = vector.load %arg9[%c0_21, %c0_22] : memref<17x8xf32, #tpu.memory_space<vmem>>, vector<1x8xf32>
    tpu.vector_store %arg9[%c0_21, %c0_22], %21 {strides = array<i32>} : memref<17x8xf32, #tpu.memory_space<vmem>>, vector<1x8xf32>,
    %c1_23 = arith.constant 1 : index
    %c0_24 = arith.constant 0 : index
    %23 = vector.load %arg9[%c1_23, %c0_24] : memref<17x8xf32, #tpu.memory_space<vmem>>, vector<16x8xf32>
    tpu.vector_store %arg9[%c1_23, %c0_24], %20 {strides = array<i32>} : memref<17x8xf32, #tpu.memory_space<vmem>>, vector<16x8xf32>,
    %cst_25 = arith.constant 0.000000e+00 : f32
    %24 = vector.broadcast %cst_25 : f32 to vector<16x8xf32>
    %c0_26 = arith.constant 0 : index
    %c0_27 = arith.constant 0 : index
    %25 = vector.load %arg9[%c0_26, %c0_27] : memref<17x8xf32, #tpu.memory_space<vmem>>, vector<16x8xf32>
    %c0_28 = arith.constant 0 : index
    %c0_29 = arith.constant 0 : index
    %c0_30 = arith.constant 0 : index
    %26 = vector.load %arg4[%c0_28, %c0_29, %c0_30] : memref<2x8x8xf32, #tpu.memory_space<vmem>>, vector<1x8x8xf32>
    %27 = vector.shape_cast %26 : vector<1x8x8xf32> to vector<8x8xf32>
    %cst_31 = arith.constant dense<0.000000e+00> : vector<16x8xf32>
    %28 = tpu.matmul %25, %27, %cst_31 {dimension_numbers = #tpu.dot_dimension_numbers<[1], [0], [0], [1], [0, 0, 1, 1], [], []>} : vector<16x8xf32>, vector<8x8xf32>, vector<16x8xf32> -> vector<16x8xf32>
    %29 = arith.addf %24, %28 : vector<16x8xf32>
    %c1_32 = arith.constant 1 : index
    %c0_33 = arith.constant 0 : index
    %30 = vector.load %arg9[%c1_32, %c0_33] : memref<17x8xf32, #tpu.memory_space<vmem>>, vector<16x8xf32>
    %c1_34 = arith.constant 1 : index
    %c0_35 = arith.constant 0 : index
    %c0_36 = arith.constant 0 : index
    %31 = vector.load %arg4[%c1_34, %c0_35, %c0_36] : memref<2x8x8xf32, #tpu.memory_space<vmem>>, vector<1x8x8xf32>
    %32 = vector.shape_cast %31 : vector<1x8x8xf32> to vector<8x8xf32>
    %cst_37 = arith.constant dense<0.000000e+00> : vector<16x8xf32>
    %33 = tpu.matmul %30, %32, %cst_37 {dimension_numbers = #tpu.dot_dimension_numbers<[1], [0], [0], [1], [0, 0, 1, 1], [], []>} : vector<16x8xf32>, vector<8x8xf32>, vector<16x8xf32> -> vector<16x8xf32>
    %34 = arith.addf %29, %33 : vector<16x8xf32>
    %c0_38 = arith.constant 0 : index
    %c0_39 = arith.constant 0 : index
    %35 = vector.load %arg5[%c0_38, %c0_39] : memref<1x8xf32, #tpu.memory_space<vmem>>, vector<1x8xf32>
    %36 = vector.broadcast %35 : vector<1x8xf32> to vector<16x8xf32>
    %37 = arith.addf %34, %36 : vector<16x8xf32>
    %cst_40 = arith.constant 0.000000e+00 : f32
    %38 = vector.broadcast %cst_40 : f32 to vector<16x8xf32>
    %39 = arith.maximumf %37, %38 : vector<16x8xf32>
    %c0_41 = arith.constant 0 : index
    %c0_42 = arith.constant 0 : index
    %c0_43 = arith.constant 0 : index
    %40 = vector.load %arg1[%c0_41, %c0_42, %c0_43] : memref<1x16x4xf32, #tpu.memory_space<vmem>>, vector<1x16x4xf32>
    %41 = vector.shape_cast %40 : vector<1x16x4xf32> to vector<16x4xf32>
    %c0_44 = arith.constant 0 : index
    %c0_45 = arith.constant 0 : index
    %42 = vector.load %arg6[%c0_44, %c0_45] : memref<4x8xf32, #tpu.memory_space<vmem>>, vector<4x8xf32>
    %cst_46 = arith.constant dense<0.000000e+00> : vector<16x8xf32>
    %43 = tpu.matmul %41, %42, %cst_46 {dimension_numbers = #tpu.dot_dimension_numbers<[1], [0], [0], [1], [0, 0, 1, 1], [], []>} : vector<16x4xf32>, vector<4x8xf32>, vector<16x8xf32> -> vector<16x8xf32>
    %c0_47 = arith.constant 0 : index
    %c0_48 = arith.constant 0 : index
    %44 = vector.load %arg7[%c0_47, %c0_48] : memref<1x8xf32, #tpu.memory_space<vmem>>, vector<1x8xf32>
    %45 = vector.broadcast %44 : vector<1x8xf32> to vector<16x8xf32>
    %46 = arith.addf %43, %45 : vector<16x8xf32>
    %47 = arith.addf %39, %46 : vector<16x8xf32>
    %cst_49 = arith.constant 0.000000e+00 : f32
    %48 = vector.broadcast %cst_49 : f32 to vector<16x8xf32>
    %49 = arith.maximumf %47, %48 : vector<16x8xf32>
    %c0_50 = arith.constant 0 : index
    %c0_51 = arith.constant 0 : index
    %c0_52 = arith.constant 0 : index
    %50 = vector.load %arg8[%c0_50, %c0_51, %c0_52] : memref<1x16x8xf32, #tpu.memory_space<vmem>>, vector<1x16x8xf32>
    %51 = vector.shape_cast %50 : vector<1x16x8xf32> to vector<16x8xf32>
    %52 = vector.shape_cast %49 : vector<16x8xf32> to vector<1x16x8xf32>
    tpu.vector_store %arg8[%c0_50, %c0_51, %c0_52], %52 {strides = array<i32>} : memref<1x16x8xf32, #tpu.memory_space<vmem>>, vector<1x16x8xf32>,
    return
  }
  func.func @transform_0(%arg0: i32) -> (i32, i32, i32) {
    %c0_i32 = arith.constant 0 : i32
    %c0_i32_0 = arith.constant 0 : i32
    %c0_i32_1 = arith.constant 0 : i32
    return %arg0, %c0_i32, %c0_i32_0 : i32, i32, i32
  }
  func.func @transform_1(%arg0: i32) -> (i32, i32, i32) {
    %c0_i32 = arith.constant 0 : i32
    %c0_i32_0 = arith.constant 0 : i32
    %c0_i32_1 = arith.constant 0 : i32
    %c0_i32_2 = arith.constant 0 : i32
    return %c0_i32, %c0_i32_0, %c0_i32_1 : i32, i32, i32
  }
  func.func @transform_2(%arg0: i32) -> (i32, i32) {
    %c0_i32 = arith.constant 0 : i32
    %c0_i32_0 = arith.constant 0 : i32
    %c0_i32_1 = arith.constant 0 : i32
    return %c0_i32, %c0_i32_0 : i32, i32
  }
  func.func @transform_3(%arg0: i32) -> (i32, i32, i32) {
    %c0_i32 = arith.constant 0 : i32
    %c0_i32_0 = arith.constant 0 : i32
    %c0_i32_1 = arith.constant 0 : i32
    %c0_i32_2 = arith.constant 0 : i32
    return %c0_i32, %c0_i32_0, %c0_i32_1 : i32, i32, i32
  }
  func.func @transform_4(%arg0: i32) -> (i32, i32) {
    %c0_i32 = arith.constant 0 : i32
    %c0_i32_0 = arith.constant 0 : i32
    %c0_i32_1 = arith.constant 0 : i32
    return %c0_i32, %c0_i32_0 : i32, i32
  }
  func.func @transform_5(%arg0: i32) -> (i32, i32) {
    %c0_i32 = arith.constant 0 : i32
    %c0_i32_0 = arith.constant 0 : i32
    %c0_i32_1 = arith.constant 0 : i32
    return %c0_i32, %c0_i32_0 : i32, i32
  }
  func.func @transform_6(%arg0: i32) -> (i32, i32) {
    %c0_i32 = arith.constant 0 : i32
    %c0_i32_0 = arith.constant 0 : i32
    %c0_i32_1 = arith.constant 0 : i32
    return %c0_i32, %c0_i32_0 : i32, i32
  }
  func.func @transform_7(%arg0: i32) -> (i32, i32, i32) {
    %c0_i32 = arith.constant 0 : i32
    %c0_i32_0 = arith.constant 0 : i32
    %c0_i32_1 = arith.constant 0 : i32
    return %arg0, %c0_i32, %c0_i32_0 : i32, i32, i32
  }
}

</mosaic_0001>

<llo_original>
// kernel: tpu_custom_call.1
$region0: #{tpu_custom_call.1}
  #allocation0 [shape = 'u32[]', space=smem, size = 0x4, offset = 0x4, fixed_abs, tag = 'smem constant byte address 0x4 - core index']
  #allocation1 [shape = 'u32[144,128]{1,0:T(1,128)}', space=vmem, size = 0x12000, scoped, tag = 'internal scratch']
  #allocation2 [shape = 'f32[17,8]{1,0:T(8,128)}', space=vmem, size = 0x3000, scoped, tag = 'scratch operand']
  #allocation3 [shape = 'f32[18,4]{1,0:T(8,128)}', space=vmem, size = 0x3000, scoped, tag = 'scratch operand']
  %s0 = inlined_call_operand.vmem [shape: f32[2,16,4], index: 0, kind: input, shape index: {}]
  %s1 = inlined_call_operand.vmem [shape: f32[2,4,8], index: 1, kind: input, shape index: {}]
  %s2 = inlined_call_operand.vmem [shape: f32[1,8], index: 2, kind: input, shape index: {}]
  %s3 = inlined_call_operand.vmem [shape: f32[2,8,8], index: 3, kind: input, shape index: {}]
  %s4 = inlined_call_operand.vmem [shape: f32[1,8], index: 4, kind: input, shape index: {}]
  %s5 = inlined_call_operand.vmem [shape: f32[4,8], index: 5, kind: input, shape index: {}]
  %s6 = inlined_call_operand.vmem [shape: f32[1,8], index: 6, kind: input, shape index: {}]
  %s7 = inlined_call_operand.vmem [shape: f32[2,16,8], index: 7, kind: output, shape index: {}]
  %s8 = sld [smem:[#allocation0]]
  $region61: #{tpu_custom_call.1} parent=0
    _
  %s10 = ssub.s32 1, %s8
  %s11 = scalar_select 0, %s10, %s8
  loop: start=0, step=1, limit=4
  $region2: #{tpu_custom_call.1} parent=0 // loop_pre_header
    _
  $region3: #{tpu_custom_call.1} parent=0 // loop_header
    %s13 = sphi 0, %s17
    %p14 = scmp.ge.s32.totalorder %s13, 4
    %s23 = sphi 0, %s25
    %s26 = sphi 0, %s23
    %s27 = sphi 0, %s26
    %s43 = sphi 0, %s27
    %s47 = sphi 0, %s47
    %s49 = sphi 0, %s47
    %s50 = sphi 0, %s49
    %s64 = sphi 0, %s50
    %s68 = sphi 0, %s68
    %s70 = sphi 0, %s68
    %s71 = sphi 0, %s70
    %s85 = sphi 0, %s71
    %s89 = sphi 0, %s89
    %s91 = sphi 0, %s89
    %s92 = sphi 0, %s91
    %s106 = sphi 0, %s92
    %s110 = sphi 0, %s110
    %s112 = sphi 0, %s110
    %s113 = sphi 0, %s112
    %s127 = sphi 0, %s113
    %s131 = sphi 0, %s131
    %s133 = sphi 0, %s131
    %s134 = sphi 0, %s133
    %s148 = sphi 0, %s134
    %s152 = sphi 0, %s152
    %s154 = sphi 0, %s152
    %s155 = sphi 0, %s154
    %s169 = sphi 0, %s155
    %s175 = sphi 0, %s177
    %s178 = sphi 0, %s175
    %s179 = sphi 0, %s178
    %s195 = sphi 0, %s179
  $region4: #{tpu_custom_call.1} parent=0 // loop_header_branch
    %16 = sbr.rel (%p14) target = $region8
  $region5: #{tpu_custom_call.1} parent=0 // loop_body
    %s18 = ssub.s32 %s13, 1
    %s19 = ssub.s32 %s13, 2
    %s20 = sadd.s32 %s13, 1
    %s21 = ssub.s32 %s13, %s20
    %p22 = scmp.eq.s32.totalorder %s21, 0
    %s24 = sadd.s32 %s23, 1
    %s25 = scalar_select %p22, %s23, %s24
    %p28 = pneg %p22
    %p29 = scmp.eq.s32.totalorder %s13, 1
    %p30 = por %p28, %p29
    %p31 = scmp.ne.s32.totalorder %s23, %s26
    %p32 = scmp.eq.s32.totalorder %s13, 0
    %p33 = por %p31, %p32
    %p34 = scmp.ne.s32.totalorder %s23, %s26
    %p35 = scmp.eq.s32.totalorder %s18, 1
    %p36 = por %p34, %p35
    %p37 = scmp.ne.s32.totalorder %s26, %s27
    %p38 = scmp.eq.s32.totalorder %s18, 0
    %p39 = por %p37, %p38
    %p40 = scmp.ne.s32.totalorder %s26, %s27
    %p41 = scmp.eq.s32.totalorder %s19, 1
    %p42 = por %p40, %p41
    %p44 = scmp.ne.s32.totalorder %s27, %s43
    %p45 = scmp.eq.s32.totalorder %s19, 0
    %p46 = por %p44, %p45
    %s48 = sadd.s32 %s47, 1
    %p51 = scmp.eq.s32.totalorder %s13, 1
    %p52 = scmp.ne.s32.totalorder %s47, %s49
    %p53 = scmp.eq.s32.totalorder %s13, 0
    %p54 = por %p52, %p53
    %p55 = scmp.ne.s32.totalorder %s47, %s49
    %p56 = scmp.eq.s32.totalorder %s18, 1
    %p57 = por %p55, %p56
    %p58 = scmp.ne.s32.totalorder %s49, %s50
    %p59 = scmp.eq.s32.totalorder %s18, 0
    %p60 = por %p58, %p59
    %p61 = scmp.ne.s32.totalorder %s49, %s50
    %p62 = scmp.eq.s32.totalorder %s19, 1
    %p63 = por %p61, %p62
    %p65 = scmp.ne.s32.totalorder %s50, %s64
    %p66 = scmp.eq.s32.totalorder %s19, 0
    %p67 = por %p65, %p66
    %s69 = sadd.s32 %s68, 1
    %p72 = scmp.eq.s32.totalorder %s13, 1
    %p73 = scmp.ne.s32.totalorder %s68, %s70
    %p74 = scmp.eq.s32.totalorder %s13, 0
    %p75 = por %p73, %p74
    %p76 = scmp.ne.s32.totalorder %s68, %s70
    %p77 = scmp.eq.s32.totalorder %s18, 1
    %p78 = por %p76, %p77
    %p79 = scmp.ne.s32.totalorder %s70, %s71
    %p80 = scmp.eq.s32.totalorder %s18, 0
    %p81 = por %p79, %p80
    %p82 = scmp.ne.s32.totalorder %s70, %s71
    %p83 = scmp.eq.s32.totalorder %s19, 1
    %p84 = por %p82, %p83
    %p86 = scmp.ne.s32.totalorder %s71, %s85
    %p87 = scmp.eq.s32.totalorder %s19, 0
    %p88 = por %p86, %p87
    %s90 = sadd.s32 %s89, 1
    %p93 = scmp.eq.s32.totalorder %s13, 1
    %p94 = scmp.ne.s32.totalorder %s89, %s91
    %p95 = scmp.eq.s32.totalorder %s13, 0
    %p96 = por %p94, %p95
    %p97 = scmp.ne.s32.totalorder %s89, %s91
    %p98 = scmp.eq.s32.totalorder %s18, 1
    %p99 = por %p97, %p98
    %p100 = scmp.ne.s32.totalorder %s91, %s92
    %p101 = scmp.eq.s32.totalorder %s18, 0
    %p102 = por %p100, %p101
    %p103 = scmp.ne.s32.totalorder %s91, %s92
    %p104 = scmp.eq.s32.totalorder %s19, 1
    %p105 = por %p103, %p104
    %p107 = scmp.ne.s32.totalorder %s92, %s106
    %p108 = scmp.eq.s32.totalorder %s19, 0
    %p109 = por %p107, %p108
    %s111 = sadd.s32 %s110, 1
    %p114 = scmp.eq.s32.totalorder %s13, 1
    %p115 = scmp.ne.s32.totalorder %s110, %s112
    %p116 = scmp.eq.s32.totalorder %s13, 0
    %p117 = por %p115, %p116
    %p118 = scmp.ne.s32.totalorder %s110, %s112
    %p119 = scmp.eq.s32.totalorder %s18, 1
    %p120 = por %p118, %p119
    %p121 = scmp.ne.s32.totalorder %s112, %s113
    %p122 = scmp.eq.s32.totalorder %s18, 0
    %p123 = por %p121, %p122
    %p124 = scmp.ne.s32.totalorder %s112, %s113
    %p125 = scmp.eq.s32.totalorder %s19, 1
    %p126 = por %p124, %p125
    %p128 = scmp.ne.s32.totalorder %s113, %s127
    %p129 = scmp.eq.s32.totalorder %s19, 0
    %p130 = por %p128, %p129
    %s132 = sadd.s32 %s131, 1
    %p135 = scmp.eq.s32.totalorder %s13, 1
    %p136 = scmp.ne.s32.totalorder %s131, %s133
    %p137 = scmp.eq.s32.totalorder %s13, 0
    %p138 = por %p136, %p137
    %p139 = scmp.ne.s32.totalorder %s131, %s133
    %p140 = scmp.eq.s32.totalorder %s18, 1
    %p141 = por %p139, %p140
    %p142 = scmp.ne.s32.totalorder %s133, %s134
    %p143 = scmp.eq.s32.totalorder %s18, 0
    %p144 = por %p142, %p143
    %p145 = scmp.ne.s32.totalorder %s133, %s134
    %p146 = scmp.eq.s32.totalorder %s19, 1
    %p147 = por %p145, %p146
    %p149 = scmp.ne.s32.totalorder %s134, %s148
    %p150 = scmp.eq.s32.totalorder %s19, 0
    %p151 = por %p149, %p150
    %s153 = sadd.s32 %s152, 1
    %p156 = scmp.eq.s32.totalorder %s13, 1
    %p157 = scmp.ne.s32.totalorder %s152, %s154
    %p158 = scmp.eq.s32.totalorder %s13, 0
    %p159 = por %p157, %p158
    %p160 = scmp.ne.s32.totalorder %s152, %s154
    %p161 = scmp.eq.s32.totalorder %s18, 1
    %p162 = por %p160, %p161
    %p163 = scmp.ne.s32.totalorder %s154, %s155
    %p164 = scmp.eq.s32.totalorder %s18, 0
    %p165 = por %p163, %p164
    %p166 = scmp.ne.s32.totalorder %s154, %s155
    %p167 = scmp.eq.s32.totalorder %s19, 1
    %p168 = por %p166, %p167
    %p170 = scmp.ne.s32.totalorder %s155, %s169
    %p171 = scmp.eq.s32.totalorder %s19, 0
    %p172 = por %p170, %p171
    %s173 = ssub.s32 %s13, %s20
    %p174 = scmp.eq.s32.totalorder %s173, 0
    %s176 = sadd.s32 %s175, 1
    %s177 = scalar_select %p174, %s175, %s176
    %p180 = pneg %p174
    %p181 = scmp.eq.s32.totalorder %s13, 1
    %p182 = por %p180, %p181
    %p183 = scmp.ne.s32.totalorder %s175, %s178
    %p184 = scmp.eq.s32.totalorder %s13, 0
    %p185 = por %p183, %p184
    %p186 = scmp.ne.s32.totalorder %s175, %s178
    %p187 = scmp.eq.s32.totalorder %s18, 1
    %p188 = por %p186, %p187
    %p189 = scmp.ne.s32.totalorder %s178, %s179
    %p190 = scmp.eq.s32.totalorder %s18, 0
    %p191 = por %p189, %p190
    %p192 = scmp.ne.s32.totalorder %s178, %s179
    %p193 = scmp.eq.s32.totalorder %s19, 1
    %p194 = por %p192, %p193
    %p196 = scmp.ne.s32.totalorder %s179, %s195
    %p197 = scmp.eq.s32.totalorder %s19, 0
    %p198 = por %p196, %p197
    %p199 = scmp.le.s32.totalorder 1, %s13
    %p200 = scmp.lt.s32.totalorder %s13, 3
    %p201 = pnand %p199, %p200
    %p202 = pneg %p201
    // Predicated region
    $region9: #{tpu_custom_call.1} parent=5 // pred_check
      _
    $region10: #{tpu_custom_call.1} parent=5 // pred_check_branch
      %204 = sbr.rel (%p201) target = $region12
    $region11: #{tpu_custom_call.1} parent=5 // pred_region
      %s205 = ssub.s32 %s13, 1
      // Predicated region
      $region13: #{tpu_custom_call.1} parent=11 // pred_check
        %p206 = pneg %p60
      $region14: #{tpu_custom_call.1} parent=11 // pred_check_branch
        %208 = sbr.rel (%p206) target = $region16
      $region15: #{tpu_custom_call.1} parent=11 // pred_region
        _
      $region16: #{tpu_custom_call.1} parent=11 // pred_fallthru
        _
      // Predicated region
      $region17: #{tpu_custom_call.1} parent=11 // pred_check
        %p209 = pneg %p81
      $region18: #{tpu_custom_call.1} parent=11 // pred_check_branch
        %211 = sbr.rel (%p209) target = $region20
      $region19: #{tpu_custom_call.1} parent=11 // pred_region
        _
      $region20: #{tpu_custom_call.1} parent=11 // pred_fallthru
        _
      // Predicated region
      $region21: #{tpu_custom_call.1} parent=11 // pred_check
        %p212 = pneg %p102
      $region22: #{tpu_custom_call.1} parent=11 // pred_check_branch
        %214 = sbr.rel (%p212) target = $region24
      $region23: #{tpu_custom_call.1} parent=11 // pred_region
        _
      $region24: #{tpu_custom_call.1} parent=11 // pred_fallthru
        _
      // Predicated region
      $region25: #{tpu_custom_call.1} parent=11 // pred_check
        %p215 = pneg %p123
      $region26: #{tpu_custom_call.1} parent=11 // pred_check_branch
        %217 = sbr.rel (%p215) target = $region28
      $region27: #{tpu_custom_call.1} parent=11 // pred_region
        _
      $region28: #{tpu_custom_call.1} parent=11 // pred_fallthru
        _
      // Predicated region
      $region29: #{tpu_custom_call.1} parent=11 // pred_check
        %p218 = pneg %p144
      $region30: #{tpu_custom_call.1} parent=11 // pred_check_branch
        %220 = sbr.rel (%p218) target = $region32
      $region31: #{tpu_custom_call.1} parent=11 // pred_region
        _
      $region32: #{tpu_custom_call.1} parent=11 // pred_fallthru
        _
      // Predicated region
      $region33: #{tpu_custom_call.1} parent=11 // pred_check
        %p221 = pneg %p165
      $region34: #{tpu_custom_call.1} parent=11 // pred_check_branch
        %223 = sbr.rel (%p221) target = $region36
      $region35: #{tpu_custom_call.1} parent=11 // pred_region
        _
      $region36: #{tpu_custom_call.1} parent=11 // pred_fallthru
        _
    $region12: #{tpu_custom_call.1} parent=5 // pred_fallthru
      _
    %p224 = scmp.lt.s32.totalorder %s13, 2
    // Predicated region
    $region37: #{tpu_custom_call.1} parent=5 // pred_check
      %p225 = pneg %p224
    $region38: #{tpu_custom_call.1} parent=5 // pred_check_branch
      %227 = sbr.rel (%p225) target = $region40
    $region39: #{tpu_custom_call.1} parent=5 // pred_region
      // Predicated region
      $region41: #{tpu_custom_call.1} parent=39 // pred_check
        %p228 = pneg %p33
      $region42: #{tpu_custom_call.1} parent=39 // pred_check_branch
        %230 = sbr.rel (%p228) target = $region44
      $region43: #{tpu_custom_call.1} parent=39 // pred_region
        %p231 = scmp.lt.s32.totalorder %s13, 1
        %s232 = scalar_select %p231, %s13, 1
        %s233 = smul.addr %s232, 2
        %s234 = smul.addr %s233, 8
        %s235 = scalar_lea.vmem %s0, %s234
      $region44: #{tpu_custom_call.1} parent=39 // pred_fallthru
        _
    $region40: #{tpu_custom_call.1} parent=5 // pred_fallthru
      _
    %p236 = scmp.le.s32.totalorder 1, %s13
    %p237 = scmp.lt.s32.totalorder %s13, 3
    %p238 = pnand %p236, %p237
    %p239 = pneg %p238
    // Predicated region
    $region45: #{tpu_custom_call.1} parent=5 // pred_check
      _
    $region46: #{tpu_custom_call.1} parent=5 // pred_check_branch
      %241 = sbr.rel (%p238) target = $region48
    $region47: #{tpu_custom_call.1} parent=5 // pred_region
      %s242 = ssub.s32 %s13, 1
      %p243 = scmp.lt.s32.totalorder %s18, 1
      %s244 = scalar_select %p243, %s18, 1
      %s245 = smul.addr %s244, 2
      %s246 = smul.addr %s245, 8
      %s247 = scalar_lea.vmem %s0, %s246
      %p248 = pneg %p39
      %p249 = pneg %p36
      %p250 = pneg %p60
      %p251 = pneg %p57
      %p252 = pneg %p81
      %p253 = pneg %p78
      %p254 = pneg %p102
      %p255 = pneg %p99
      %p256 = pneg %p123
      %p257 = pneg %p120
      %p258 = pneg %p144
      %p259 = pneg %p141
      %p260 = pneg %p165
      %p261 = pneg %p162
      %p262 = pneg %p191
      %p263 = pneg %p188
      %p264 = scmp.lt.s32.totalorder %s18, 1
      %s265 = scalar_select %p264, %s18, 1
      %s266 = smul.addr %s265, 2
      %s267 = smul.addr %s266, 8
      %s268 = scalar_lea.vmem %s7, %s267
      %p269 = scmp.lt.s32.totalorder %s18, 1
      %s270 = scalar_select %p269, %s18, 1
      %s271 = smul.addr %s270, 2
      %s272 = smul.addr %s271, 8
      %s273 = scalar_lea.vmem %s0, %s272
      %p274 = scmp.lt.s32.totalorder %s18, 1
      %s275 = scalar_select %p274, %s18, 1
      %s276 = smul.addr %s275, 2
      %s277 = smul.addr %s276, 8
      %s278 = scalar_lea.vmem %s7, %s277
      %vm279 = vcmask 25600
      %280 = vst.msk [vmem:[#allocation3] sm:$0x3] %vm279, 0.0
      %v281 = vld [vmem:[%s273] sm:$0xff]
      %v282 = vld [vmem:[%s273 + $0x8] sm:$0xff]
      %vm283 = vcmask 31744
      %284 = vst.msk [vmem:[#allocation3 + $0x2] sm:$0xff] %vm283, %v281
      %285 = vst.msk [vmem:[#allocation3 + $0xa] sm:$0xff] %vm283, %v282
      %v286 = vld [vmem:[#allocation3 + $0x1] sm:$0xff]
      %v287 = vld [vmem:[#allocation3 + $0x9] sm:$0xff]
      %v288 = vld [vmem:[%s1] sm:$0xf]
      %v289 = vld [vmem:[#allocation3 + $0x2] sm:$0xff]
      %v290 = vld [vmem:[#allocation3 + $0xa] sm:$0xff]
      %s291 = scalar_lea.vmem %s1, 4
      %v292 = vld [vmem:[%s291] sm:$0xf]
      %v294 = vsel %vm283, %v289, 0
      %v297 = vsel %vm283, %v290, 0
      %vm299 = vcmask 1043456
      %v301 = vsel %vm299, %v292, 0
      %303 = vmatprep.subr.mxu0 0.0
      %304 = vmatpush1.msra.mxu0 %v301
      %305 = vmatprep.subr.mxu0 0.0
      %306 = vmatpush1.msra.mxu0 0.0
      %307 = vmatprep.subr.mxu0 0.0
      %308 = vmatpush1.msra.mxu0 0.0
      %309 = vmatprep.subr.mxu0 0.0
      %310 = vmatpush1.msra.mxu0 0.0
      %311 = vmatprep.subr.mxu0 0.0
      %312 = vmatpush1.msra.mxu0 0.0
      %313 = vmatprep.subr.mxu0 0.0
      %314 = vmatpush1.msra.mxu0 0.0
      %315 = vmatprep.subr.mxu0 0.0
      %316 = vmatpush1.msra.mxu0 0.0
      %317 = vmatprep.subr.mxu0 0.0
      %318 = vmatpush1.msra.mxu0 0.0
      %319 = vmatprep.subr.mxu0 0.0
      %320 = vmatpush1.msra.mxu0 0.0
      %321 = vmatprep.subr.mxu0 0.0
      %322 = vmatpush1.msra.mxu0 0.0
      %323 = vmatprep.subr.mxu0 0.0
      %324 = vmatpush1.msra.mxu0 0.0
      %325 = vmatprep.subr.mxu0 0.0
      %326 = vmatpush1.msra.mxu0 0.0
      %327 = vmatprep.subr.mxu0 0.0
      %328 = vmatpush1.msra.mxu0 0.0
      %329 = vmatprep.subr.mxu0 0.0
      %330 = vmatpush1.msra.mxu0 0.0
      %331 = vmatprep.subr.mxu0 0.0
      %332 = vmatpush1.msra.mxu0 0.0
      %333 = vmatprep.subr.mxu0 0.0
      %334 = vmatpush1.msra.mxu0 0.0
      %335 = vmatprep.subr.mxu0 0.0
      %336 = vmatpush1.msra.mxu0 0.0
      %337 = vmatprep.subr.mxu0 0.0
      %338 = vmatpush1.msra.mxu0 0.0
      %339 = vmatprep.subr.mxu0 0.0
      %340 = vmatpush1.msra.mxu0 0.0
      %341 = vmatprep.subr.mxu0 0.0
      %342 = vmatpush1.msra.mxu0 0.0
      %343 = vmatprep.subr.mxu0 0.0
      %344 = vmatpush1.msra.mxu0 0.0
      %345 = vmatprep.subr.mxu0 0.0
      %346 = vmatpush1.msra.mxu0 0.0
      %347 = vmatprep.subr.mxu0 0.0
      %348 = vmatpush1.msra.mxu0 0.0
      %349 = vmatprep.subr.mxu0 0.0
      %350 = vmatpush1.msra.mxu0 0.0
      %351 = vmatprep.subr.mxu0 0.0
      %352 = vmatpush1.msra.mxu0 0.0
      %353 = vmatprep.subr.mxu0 0.0
      %354 = vmatpush1.msra.mxu0 0.0
      %355 = vmatprep.subr.mxu0 0.0
      %356 = vmatpush1.msra.mxu0 0.0
      %357 = vmatprep.subr.mxu0 0.0
      %358 = vmatpush1.msra.mxu0 0.0
      %359 = vmatprep.subr.mxu0 0.0
      %360 = vmatpush1.msra.mxu0 0.0
      %361 = vmatprep.subr.mxu0 0.0
      %362 = vmatpush1.msra.mxu0 0.0
      %363 = vmatprep.subr.mxu0 0.0
      %364 = vmatpush1.msra.mxu0 0.0
      %365 = vmatprep.subr.mxu0 0.0
      %366 = vmatpush1.msra.mxu0 0.0
      %367 = vmatprep.mubr.f32.mxu0 0.0
      %368 = vmatmul.mubr.f32.gmra.mrb[0].mxu0 %v294
      %v369 = vpop.f32.mrb[0].mxu0
      %v370 = vadd.f32 0.0, %v369
      %v371 = vpop.f32.mrb[0].mxu0
      %372 = vmatprep.mubr.f32.mxu0 0.0
      %373 = vmatmul.mubr.f32.gmra.mrb[0].mxu0 %v297
      %v374 = vpop.f32.mrb[0].mxu0
      %v375 = vadd.f32 0.0, %v374
      %v376 = vpop.f32.mrb[0].mxu0
      %377 = vdwg.mxu0
      %v379 = vsel %vm283, %v286, 0
      %v382 = vsel %vm283, %v287, 0
      %v385 = vsel %vm299, %v288, 0
      %387 = vmatprep.subr.mxu0 0.0
      %388 = vmatpush1.msra.mxu0 %v385
      %389 = vmatprep.subr.mxu0 0.0
      %390 = vmatpush1.msra.mxu0 0.0
      %391 = vmatprep.subr.mxu0 0.0
      %392 = vmatpush1.msra.mxu0 0.0
      %393 = vmatprep.subr.mxu0 0.0
      %394 = vmatpush1.msra.mxu0 0.0
      %395 = vmatprep.subr.mxu0 0.0
      %396 = vmatpush1.msra.mxu0 0.0
      %397 = vmatprep.subr.mxu0 0.0
      %398 = vmatpush1.msra.mxu0 0.0
      %399 = vmatprep.subr.mxu0 0.0
      %400 = vmatpush1.msra.mxu0 0.0
      %401 = vmatprep.subr.mxu0 0.0
      %402 = vmatpush1.msra.mxu0 0.0
      %403 = vmatprep.subr.mxu0 0.0
      %404 = vmatpush1.msra.mxu0 0.0
      %405 = vmatprep.subr.mxu0 0.0
      %406 = vmatpush1.msra.mxu0 0.0
      %407 = vmatprep.subr.mxu0 0.0
      %408 = vmatpush1.msra.mxu0 0.0
      %409 = vmatprep.subr.mxu0 0.0
      %410 = vmatpush1.msra.mxu0 0.0
      %411 = vmatprep.subr.mxu0 0.0
      %412 = vmatpush1.msra.mxu0 0.0
      %413 = vmatprep.subr.mxu0 0.0
      %414 = vmatpush1.msra.mxu0 0.0
      %415 = vmatprep.subr.mxu0 0.0
      %416 = vmatpush1.msra.mxu0 0.0
      %417 = vmatprep.subr.mxu0 0.0
      %418 = vmatpush1.msra.mxu0 0.0
      %419 = vmatprep.subr.mxu0 0.0
      %420 = vmatpush1.msra.mxu0 0.0
      %421 = vmatprep.subr.mxu0 0.0
      %422 = vmatpush1.msra.mxu0 0.0
      %423 = vmatprep.subr.mxu0 0.0
      %424 = vmatpush1.msra.mxu0 0.0
      %425 = vmatprep.subr.mxu0 0.0
      %426 = vmatpush1.msra.mxu0 0.0
      %427 = vmatprep.subr.mxu0 0.0
      %428 = vmatpush1.msra.mxu0 0.0
      %429 = vmatprep.subr.mxu0 0.0
      %430 = vmatpush1.msra.mxu0 0.0
      %431 = vmatprep.subr.mxu0 0.0
      %432 = vmatpush1.msra.mxu0 0.0
      %433 = vmatprep.subr.mxu0 0.0
      %434 = vmatpush1.msra.mxu0 0.0
      %435 = vmatprep.subr.mxu0 0.0
      %436 = vmatpush1.msra.mxu0 0.0
      %437 = vmatprep.subr.mxu0 0.0
      %438 = vmatpush1.msra.mxu0 0.0
      %439 = vmatprep.subr.mxu0 0.0
      %440 = vmatpush1.msra.mxu0 0.0
      %441 = vmatprep.subr.mxu0 0.0
      %442 = vmatpush1.msra.mxu0 0.0
      %443 = vmatprep.subr.mxu0 0.0
      %444 = vmatpush1.msra.mxu0 0.0
      %445 = vmatprep.subr.mxu0 0.0
      %446 = vmatpush1.msra.mxu0 0.0
      %447 = vmatprep.subr.mxu0 0.0
      %448 = vmatpush1.msra.mxu0 0.0
      %449 = vmatprep.subr.mxu0 0.0
      %450 = vmatpush1.msra.mxu0 0.0
      %451 = vmatprep.mubr.f32.mxu0 0.0
      %452 = vmatmul.mubr.f32.gmra.mrb[0].mxu0 %v379
      %v453 = vpop.f32.mrb[0].mxu0
      %v454 = vadd.f32 %v370, %v453
      %v455 = vpop.f32.mrb[0].mxu0
      %456 = vmatprep.mubr.f32.mxu0 0.0
      %457 = vmatmul.mubr.f32.gmra.mrb[0].mxu0 %v382
      %v458 = vpop.f32.mrb[0].mxu0
      %v459 = vadd.f32 %v375, %v458
      %v460 = vpop.f32.mrb[0].mxu0
      %461 = vdwg.mxu0
      %v462 = vld [vmem:[%s2] sm:$0x1]
      %v464 = vlaneseq
      %v465 = vshrl.u32 %v464, 7
      %v466 = vsub.s32 0, %v465
      %v467 = vrot.slane %v462, %v466
      %v469 = vadd.f32 %v454, %v467
      %v470 = vadd.f32 %v459, %v467
      %v471 = vmax.f32 %v469, 0.0
      %v472 = vmax.f32 %v470, 0.0
      %vm473 = vcmask 57344
      %474 = vst.msk [vmem:[#allocation2] sm:$0x1] %vm473, 0.0
      %vm475 = vcmask 64512
      %476 = vst.msk [vmem:[#allocation2 + $0x1] sm:$0xff] %vm475, %v471
      %477 = vst.msk [vmem:[#allocation2 + $0x9] sm:$0xff] %vm475, %v472
      %v478 = vld [vmem:[#allocation2] sm:$0xff]
      %v479 = vld [vmem:[#allocation2 + $0x8] sm:$0xff]
      %v480 = vld [vmem:[%s3] sm:$0xff]
      %v481 = vld [vmem:[#allocation2 + $0x1] sm:$0xff]
      %v482 = vld [vmem:[#allocation2 + $0x9] sm:$0xff]
      %s483 = scalar_lea.vmem %s3, 8
      %v484 = vld [vmem:[%s483] sm:$0xff]
      %v486 = vsel %vm475, %v481, 0
      %v489 = vsel %vm475, %v482, 0
      %491 = vmatprep.subr.mxu0 0.0
      %492 = vmatpush1.msra.mxu0 %v484
      %493 = vmatprep.subr.mxu0 0.0
      %494 = vmatpush1.msra.mxu0 0.0
      %495 = vmatprep.subr.mxu0 0.0
      %496 = vmatpush1.msra.mxu0 0.0
      %497 = vmatprep.subr.mxu0 0.0
      %498 = vmatpush1.msra.mxu0 0.0
      %499 = vmatprep.subr.mxu0 0.0
      %500 = vmatpush1.msra.mxu0 0.0
      %501 = vmatprep.subr.mxu0 0.0
      %502 = vmatpush1.msra.mxu0 0.0
      %503 = vmatprep.subr.mxu0 0.0
      %504 = vmatpush1.msra.mxu0 0.0
      %505 = vmatprep.subr.mxu0 0.0
      %506 = vmatpush1.msra.mxu0 0.0
      %507 = vmatprep.subr.mxu0 0.0
      %508 = vmatpush1.msra.mxu0 0.0
      %509 = vmatprep.subr.mxu0 0.0
      %510 = vmatpush1.msra.mxu0 0.0
      %511 = vmatprep.subr.mxu0 0.0
      %512 = vmatpush1.msra.mxu0 0.0
      %513 = vmatprep.subr.mxu0 0.0
      %514 = vmatpush1.msra.mxu0 0.0
      %515 = vmatprep.subr.mxu0 0.0
      %516 = vmatpush1.msra.mxu0 0.0
      %517 = vmatprep.subr.mxu0 0.0
      %518 = vmatpush1.msra.mxu0 0.0
      %519 = vmatprep.subr.mxu0 0.0
      %520 = vmatpush1.msra.mxu0 0.0
      %521 = vmatprep.subr.mxu0 0.0
      %522 = vmatpush1.msra.mxu0 0.0
      %523 = vmatprep.subr.mxu0 0.0
      %524 = vmatpush1.msra.mxu0 0.0
      %525 = vmatprep.subr.mxu0 0.0
      %526 = vmatpush1.msra.mxu0 0.0
      %527 = vmatprep.subr.mxu0 0.0
      %528 = vmatpush1.msra.mxu0 0.0
      %529 = vmatprep.subr.mxu0 0.0
      %530 = vmatpush1.msra.mxu0 0.0
      %531 = vmatprep.subr.mxu0 0.0
      %532 = vmatpush1.msra.mxu0 0.0
      %533 = vmatprep.subr.mxu0 0.0
      %534 = vmatpush1.msra.mxu0 0.0
      %535 = vmatprep.subr.mxu0 0.0
      %536 = vmatpush1.msra.mxu0 0.0
      %537 = vmatprep.subr.mxu0 0.0
      %538 = vmatpush1.msra.mxu0 0.0
      %539 = vmatprep.subr.mxu0 0.0
      %540 = vmatpush1.msra.mxu0 0.0
      %541 = vmatprep.subr.mxu0 0.0
      %542 = vmatpush1.msra.mxu0 0.0
      %543 = vmatprep.subr.mxu0 0.0
      %544 = vmatpush1.msra.mxu0 0.0
      %545 = vmatprep.subr.mxu0 0.0
      %546 = vmatpush1.msra.mxu0 0.0
      %547 = vmatprep.subr.mxu0 0.0
      %548 = vmatpush1.msra.mxu0 0.0
      %549 = vmatprep.subr.mxu0 0.0
      %550 = vmatpush1.msra.mxu0 0.0
      %551 = vmatprep.subr.mxu0 0.0
      %552 = vmatpush1.msra.mxu0 0.0
      %553 = vmatprep.subr.mxu0 0.0
      %554 = vmatpush1.msra.mxu0 0.0
      %555 = vmatprep.mubr.f32.mxu0 0.0
      %556 = vmatmul.mubr.f32.gmra.mrb[0].mxu0 %v486
      %v557 = vpop.f32.mrb[0].mxu0
      %v558 = vadd.f32 0.0, %v557
      %v559 = vpop.f32.mrb[0].mxu0
      %560 = vmatprep.mubr.f32.mxu0 0.0
      %561 = vmatmul.mubr.f32.gmra.mrb[0].mxu0 %v489
      %v562 = vpop.f32.mrb[0].mxu0
      %v563 = vadd.f32 0.0, %v562
      %v564 = vpop.f32.mrb[0].mxu0
      %565 = vdwg.mxu0
      %v567 = vsel %vm475, %v478, 0
      %v570 = vsel %vm475, %v479, 0
      %572 = vmatprep.subr.mxu0 0.0
      %573 = vmatpush1.msra.mxu0 %v480
      %574 = vmatprep.subr.mxu0 0.0
      %575 = vmatpush1.msra.mxu0 0.0
      %576 = vmatprep.subr.mxu0 0.0
      %577 = vmatpush1.msra.mxu0 0.0
      %578 = vmatprep.subr.mxu0 0.0
      %579 = vmatpush1.msra.mxu0 0.0
      %580 = vmatprep.subr.mxu0 0.0
      %581 = vmatpush1.msra.mxu0 0.0
      %582 = vmatprep.subr.mxu0 0.0
      %583 = vmatpush1.msra.mxu0 0.0
      %584 = vmatprep.subr.mxu0 0.0
      %585 = vmatpush1.msra.mxu0 0.0
      %586 = vmatprep.subr.mxu0 0.0
      %587 = vmatpush1.msra.mxu0 0.0
      %588 = vmatprep.subr.mxu0 0.0
      %589 = vmatpush1.msra.mxu0 0.0
      %590 = vmatprep.subr.mxu0 0.0
      %591 = vmatpush1.msra.mxu0 0.0
      %592 = vmatprep.subr.mxu0 0.0
      %593 = vmatpush1.msra.mxu0 0.0
      %594 = vmatprep.subr.mxu0 0.0
      %595 = vmatpush1.msra.mxu0 0.0
      %596 = vmatprep.subr.mxu0 0.0
      %597 = vmatpush1.msra.mxu0 0.0
      %598 = vmatprep.subr.mxu0 0.0
      %599 = vmatpush1.msra.mxu0 0.0
      %600 = vmatprep.subr.mxu0 0.0
      %601 = vmatpush1.msra.mxu0 0.0
      %602 = vmatprep.subr.mxu0 0.0
      %603 = vmatpush1.msra.mxu0 0.0
      %604 = vmatprep.subr.mxu0 0.0
      %605 = vmatpush1.msra.mxu0 0.0
      %606 = vmatprep.subr.mxu0 0.0
      %607 = vmatpush1.msra.mxu0 0.0
      %608 = vmatprep.subr.mxu0 0.0
      %609 = vmatpush1.msra.mxu0 0.0
      %610 = vmatprep.subr.mxu0 0.0
      %611 = vmatpush1.msra.mxu0 0.0
      %612 = vmatprep.subr.mxu0 0.0
      %613 = vmatpush1.msra.mxu0 0.0
      %614 = vmatprep.subr.mxu0 0.0
      %615 = vmatpush1.msra.mxu0 0.0
      %616 = vmatprep.subr.mxu0 0.0
      %617 = vmatpush1.msra.mxu0 0.0
      %618 = vmatprep.subr.mxu0 0.0
      %619 = vmatpush1.msra.mxu0 0.0
      %620 = vmatprep.subr.mxu0 0.0
      %621 = vmatpush1.msra.mxu0 0.0
      %622 = vmatprep.subr.mxu0 0.0
      %623 = vmatpush1.msra.mxu0 0.0
      %624 = vmatprep.subr.mxu0 0.0
      %625 = vmatpush1.msra.mxu0 0.0
      %626 = vmatprep.subr.mxu0 0.0
      %627 = vmatpush1.msra.mxu0 0.0
      %628 = vmatprep.subr.mxu0 0.0
      %629 = vmatpush1.msra.mxu0 0.0
      %630 = vmatprep.subr.mxu0 0.0
      %631 = vmatpush1.msra.mxu0 0.0
      %632 = vmatprep.subr.mxu0 0.0
      %633 = vmatpush1.msra.mxu0 0.0
      %634 = vmatprep.subr.mxu0 0.0
      %635 = vmatpush1.msra.mxu0 0.0
      %636 = vmatprep.mubr.f32.mxu0 0.0
      %637 = vmatmul.mubr.f32.gmra.mrb[0].mxu0 %v567
      %v638 = vpop.f32.mrb[0].mxu0
      %v639 = vadd.f32 %v558, %v638
      %v640 = vpop.f32.mrb[0].mxu0
      %641 = vmatprep.mubr.f32.mxu0 0.0
      %642 = vmatmul.mubr.f32.gmra.mrb[0].mxu0 %v570
      %v643 = vpop.f32.mrb[0].mxu0
      %v644 = vadd.f32 %v563, %v643
      %v645 = vpop.f32.mrb[0].mxu0
      %646 = vdwg.mxu0
      %v647 = vld [vmem:[%s4] sm:$0x1]
      %v649 = vlaneseq
      %v650 = vshrl.u32 %v649, 7
      %v651 = vsub.s32 0, %v650
      %v652 = vrot.slane %v647, %v651
      %v654 = vadd.f32 %v639, %v652
      %v655 = vadd.f32 %v644, %v652
      %v656 = vmax.f32 %v654, 0.0
      %v657 = vmax.f32 %v655, 0.0
      %v658 = vld [vmem:[%s273] sm:$0xff]
      %v659 = vld [vmem:[%s273 + $0x8] sm:$0xff]
      %v660 = vld [vmem:[%s5] sm:$0xf]
      %v661 = vld [vmem:[%s6] sm:$0x1]
      %v663 = vlaneseq
      %v664 = vshrl.u32 %v663, 7
      %v665 = vsub.s32 0, %v664
      %v666 = vrot.slane %v661, %v665
      %v669 = vsel %vm283, %v658, 0
      %v672 = vsel %vm283, %v659, 0
      %v675 = vsel %vm299, %v660, 0
      %677 = vmatprep.subr.mxu0 0.0
      %678 = vmatpush1.msra.mxu0 %v675
      %679 = vmatprep.subr.mxu0 0.0
      %680 = vmatpush1.msra.mxu0 0.0
      %681 = vmatprep.subr.mxu0 0.0
      %682 = vmatpush1.msra.mxu0 0.0
      %683 = vmatprep.subr.mxu0 0.0
      %684 = vmatpush1.msra.mxu0 0.0
      %685 = vmatprep.subr.mxu0 0.0
      %686 = vmatpush1.msra.mxu0 0.0
      %687 = vmatprep.subr.mxu0 0.0
      %688 = vmatpush1.msra.mxu0 0.0
      %689 = vmatprep.subr.mxu0 0.0
      %690 = vmatpush1.msra.mxu0 0.0
      %691 = vmatprep.subr.mxu0 0.0
      %692 = vmatpush1.msra.mxu0 0.0
      %693 = vmatprep.subr.mxu0 0.0
      %694 = vmatpush1.msra.mxu0 0.0
      %695 = vmatprep.subr.mxu0 0.0
      %696 = vmatpush1.msra.mxu0 0.0
      %697 = vmatprep.subr.mxu0 0.0
      %698 = vmatpush1.msra.mxu0 0.0
      %699 = vmatprep.subr.mxu0 0.0
      %700 = vmatpush1.msra.mxu0 0.0
      %701 = vmatprep.subr.mxu0 0.0
      %702 = vmatpush1.msra.mxu0 0.0
      %703 = vmatprep.subr.mxu0 0.0
      %704 = vmatpush1.msra.mxu0 0.0
      %705 = vmatprep.subr.mxu0 0.0
      %706 = vmatpush1.msra.mxu0 0.0
      %707 = vmatprep.subr.mxu0 0.0
      %708 = vmatpush1.msra.mxu0 0.0
      %709 = vmatprep.subr.mxu0 0.0
      %710 = vmatpush1.msra.mxu0 0.0
      %711 = vmatprep.subr.mxu0 0.0
      %712 = vmatpush1.msra.mxu0 0.0
      %713 = vmatprep.subr.mxu0 0.0
      %714 = vmatpush1.msra.mxu0 0.0
      %715 = vmatprep.subr.mxu0 0.0
      %716 = vmatpush1.msra.mxu0 0.0
      %717 = vmatprep.subr.mxu0 0.0
      %718 = vmatpush1.msra.mxu0 0.0
      %719 = vmatprep.subr.mxu0 0.0
      %720 = vmatpush1.msra.mxu0 0.0
      %721 = vmatprep.subr.mxu0 0.0
      %722 = vmatpush1.msra.mxu0 0.0
      %723 = vmatprep.subr.mxu0 0.0
      %724 = vmatpush1.msra.mxu0 0.0
      %725 = vmatprep.subr.mxu0 0.0
      %726 = vmatpush1.msra.mxu0 0.0
      %727 = vmatprep.subr.mxu0 0.0
      %728 = vmatpush1.msra.mxu0 0.0
      %729 = vmatprep.subr.mxu0 0.0
      %730 = vmatpush1.msra.mxu0 0.0
      %731 = vmatprep.subr.mxu0 0.0
      %732 = vmatpush1.msra.mxu0 0.0
      %733 = vmatprep.subr.mxu0 0.0
      %734 = vmatpush1.msra.mxu0 0.0
      %735 = vmatprep.subr.mxu0 0.0
      %736 = vmatpush1.msra.mxu0 0.0
      %737 = vmatprep.subr.mxu0 0.0
      %738 = vmatpush1.msra.mxu0 0.0
      %739 = vmatprep.subr.mxu0 0.0
      %740 = vmatpush1.msra.mxu0 0.0
      %741 = vmatprep.mubr.f32.mxu0 0.0
      %742 = vmatmul.mubr.f32.gmra.mrb[0].mxu0 %v669
      %v743 = vpop.f32.mrb[0].mxu0
      %v744 = vadd.f32 %v666, %v743
      %v745 = vpop.f32.mrb[0].mxu0
      %746 = vmatprep.mubr.f32.mxu0 0.0
      %747 = vmatmul.mubr.f32.gmra.mrb[0].mxu0 %v672
      %v748 = vpop.f32.mrb[0].mxu0
      %v749 = vadd.f32 %v666, %v748
      %v750 = vpop.f32.mrb[0].mxu0
      %751 = vdwg.mxu0
      %v752 = vadd.f32 %v656, %v744
      %v753 = vadd.f32 %v657, %v749
      %v754 = vmax.f32 %v752, 0.0
      %v755 = vmax.f32 %v753, 0.0
      %756 = vst.msk [vmem:[%s278] sm:$0xff] %vm475, %v754
      %757 = vst.msk [vmem:[%s278 + $0x8] sm:$0xff] %vm475, %v755
      %p758 = scmp.lt.s32.totalorder %s18, 1
      %s759 = scalar_select %p758, %s18, 1
      %s760 = smul.addr %s759, 2
      %s761 = smul.addr %s760, 8
      %s762 = scalar_lea.vmem %s7, %s761
      // Predicated region
      $region49: #{tpu_custom_call.1} parent=47 // pred_check
        %p763 = pneg %p188
      $region50: #{tpu_custom_call.1} parent=47 // pred_check_branch
        %765 = sbr.rel (%p763) target = $region52
      $region51: #{tpu_custom_call.1} parent=47 // pred_region
        _
      $region52: #{tpu_custom_call.1} parent=47 // pred_fallthru
        _
    $region48: #{tpu_custom_call.1} parent=5 // pred_fallthru
      _
    %p766 = scmp.le.s32.totalorder 2, %s13
    // Predicated region
    $region53: #{tpu_custom_call.1} parent=5 // pred_check
      %p767 = pneg %p766
    $region54: #{tpu_custom_call.1} parent=5 // pred_check_branch
      %769 = sbr.rel (%p767) target = $region56
    $region55: #{tpu_custom_call.1} parent=5 // pred_region
      %s770 = ssub.s32 %s13, 2
      // Predicated region
      $region57: #{tpu_custom_call.1} parent=55 // pred_check
        %p771 = pneg %p194
      $region58: #{tpu_custom_call.1} parent=55 // pred_check_branch
        %773 = sbr.rel (%p771) target = $region60
      $region59: #{tpu_custom_call.1} parent=55 // pred_region
        %p774 = scmp.lt.s32.totalorder %s19, 1
        %s775 = scalar_select %p774, %s19, 1
        %s776 = smul.addr %s775, 2
        %s777 = smul.addr %s776, 8
        %s778 = scalar_lea.vmem %s7, %s777
      $region60: #{tpu_custom_call.1} parent=55 // pred_fallthru
        _
    $region56: #{tpu_custom_call.1} parent=5 // pred_fallthru
      _
  $region6: #{tpu_custom_call.1} parent=0 // loop_footer
    %s17 = sadd.s32 1, %s13
  $region7: #{tpu_custom_call.1} parent=0 // loop_footer_branch
    %12 = sbr.rel target = $region3
  $region8: #{tpu_custom_call.1} parent=0 // loop_exit
    _

</llo_original>
